<compile_context>
chip_gen: v7x
topology: tpu7x:2x2x1
jax: 0.10.0
libtpu: 0.0.40
codegen_flags: <defaults>
</compile_context>

<pallas_src>
import math

import jax
import jax.numpy as jnp
from jax import lax
from jax.experimental import pallas as pl
from jax.experimental.pallas import tpu as pltpu


def swiglu_kernel(x_ref, w1_ref, w3_ref, w2_ref, o_ref, acc_ref):
    """Grid = (M tiles, d_ff tiles).  d_ff (axis 1) is the reduction axis."""
    k = pl.program_id(1)

    @pl.when(k == 0)
    def _():
        acc_ref[...] = jnp.zeros_like(acc_ref)

    x = x_ref[...]                                   # (tm, d_model)
    w1 = w1_ref[...]                                 # (tf, d_model)
    w3 = w3_ref[...]                                 # (tf, d_model)
    w2 = w2_ref[...]                                 # (d_model, tf)

    # Up-projections on the MXU: contract d_model of x with d_model of W1/W3.
    dn = (((1,), (1,)), ((), ()))
    h1 = lax.dot_general(x, w1, dn, preferred_element_type=jnp.float32)  # (tm, tf)
    h3 = lax.dot_general(x, w3, dn, preferred_element_type=jnp.float32)  # (tm, tf)

    # SiLU gate in f32 (VPU/EUP slots, free under the MXU).
    z = h1 * jax.nn.sigmoid(h1) * h3                 # (tm, tf) f32

    # Partial down-projection: contract tf of z with tf of W2 -> (tm, d_model).
    acc_ref[...] += lax.dot_general(
        z.astype(w2.dtype), w2, dn, preferred_element_type=jnp.float32
    )

    @pl.when(k == pl.num_programs(1) - 1)
    def _():
        o_ref[...] = acc_ref[...].astype(o_ref.dtype)


def _choose_tf(d_ff, tf_max=512):
    """Pick a d_ff tile: full d_ff if small, else a multiple-of-128 divisor."""
    if d_ff <= tf_max:
        return d_ff
    for tf in (512, 384, 256, 128):
        if tf <= tf_max and d_ff % tf == 0:
            return tf
    return tf_max  # d_ff will be zero-padded up to a multiple of tf_max


def swiglu_pallas(x, W1, W2, W3, *, tm=256, tf_max=512):
    """SwiGLU forward. x: (..., d_model); W1,W3: (d_ff, d_model); W2: (d_model, d_ff)."""
    d_ff, d_model = W1.shape
    assert W2.shape == (d_model, d_ff)
    assert W3.shape == (d_ff, d_model)
    orig_shape = x.shape
    assert orig_shape[-1] == d_model

    # ---- flatten leading dims into M token rows, tile M ----
    x2 = x.reshape(-1, d_model)
    M = x2.shape[0]
    # Don't use a tile bigger than the (8-aligned) problem; keep sublane-aligned.
    tm_eff = min(tm, 8 * pl.cdiv(M, 8))
    tm_eff = max(8, (tm_eff // 8) * 8)
    M_pad = tm_eff * pl.cdiv(M, tm_eff)
    if M_pad != M:
        x2 = jnp.pad(x2, ((0, M_pad - M), (0, 0)))

    # ---- tile d_ff (reduction axis); pad weights only if tf doesn't divide ----
    tf = _choose_tf(d_ff, tf_max)
    F_pad = tf * pl.cdiv(d_ff, tf)
    if F_pad != d_ff:
        # Zero-padded d_ff rows/cols contribute silu(0)*0 = 0 -> no-op.
        W1 = jnp.pad(W1, ((0, F_pad - d_ff), (0, 0)))
        W3 = jnp.pad(W3, ((0, F_pad - d_ff), (0, 0)))
        W2 = jnp.pad(W2, ((0, 0), (0, F_pad - d_ff)))

    grid = (M_pad // tm_eff, F_pad // tf)

    # ---- VMEM budget: double-buffered tiles + f32 accumulator (+ headroom) ----
    xb = x2.dtype.itemsize
    wb = W1.dtype.itemsize
    ob = x.dtype.itemsize
    vmem_bytes = (
        2 * tm_eff * d_model * xb          # x tile (double-buffered)
        + 2 * 2 * tf * d_model * wb        # W1, W3 tiles
        + 2 * d_model * tf * wb            # W2 tile
        + tm_eff * d_model * 4             # f32 accumulator scratch
        + 2 * tm_eff * d_model * ob        # output tile
    )
    vmem_limit = int(min(100 * 1024 * 1024, max(32 * 1024 * 1024, 2 * vmem_bytes)))

    out = pl.pallas_call(
        swiglu_kernel,
        out_shape=jax.ShapeDtypeStruct((M_pad, d_model), x.dtype),
        grid_spec=pltpu.PrefetchScalarGridSpec(
            num_scalar_prefetch=0,
            grid=grid,
            in_specs=[
                pl.BlockSpec((tm_eff, d_model), lambda i, k: (i, 0)),   # x (resident over k)
                pl.BlockSpec((tf, d_model), lambda i, k: (k, 0)),       # W1 slice
                pl.BlockSpec((tf, d_model), lambda i, k: (k, 0)),       # W3 slice
                pl.BlockSpec((d_model, tf), lambda i, k: (0, k)),       # W2 slice
            ],
            out_specs=pl.BlockSpec((tm_eff, d_model), lambda i, k: (i, 0)),
            scratch_shapes=[pltpu.VMEM((tm_eff, d_model), jnp.float32)],
        ),
        compiler_params=pltpu.CompilerParams(
            dimension_semantics=("parallel", "arbitrary"),
            vmem_limit_bytes=vmem_limit,
        ),
    )(x2, W1, W3, W2)

    return out[:M].reshape(orig_shape)


def init_swiglu_params(key, d_model, d_ff=None, dtype=jnp.float32):
    """Deterministic truncated-normal init matching the PyTorch module."""
    if d_ff is None:
        d_ff = 8 / 3 * d_model
        d_ff = 64 * math.ceil(d_ff / 64)
    stdev = (2.0 / (d_ff + d_model)) ** 0.5
    k1, k2, k3 = jax.random.split(key, 3)
    W1 = stdev * jax.random.truncated_normal(k1, -3.0, 3.0, (d_ff, d_model), dtype)
    W2 = stdev * jax.random.truncated_normal(k2, -3.0, 3.0, (d_model, d_ff), dtype)
    W3 = stdev * jax.random.truncated_normal(k3, -3.0, 3.0, (d_ff, d_model), dtype)
    return W1, W2, W3


if __name__ == "__main__":
    key = jax.random.PRNGKey(0)
    batch, seq, d_model = 2, 8, 64
    # d_ff follows the module's default rule: 64 * ceil(8/3 * d_model / 64) = 192
    W1, W2, W3 = init_swiglu_params(key, d_model)

    kx = jax.random.fold_in(key, 7)
    x = jax.random.normal(kx, (batch, seq, d_model), dtype=jnp.float32)

    out = swiglu_pallas(x, W1, W2, W3)
    out = jax.block_until_ready(out)

    # Pure-JAX reference check.
    h1 = jnp.einsum("bsd,fd->bsf", x, W1)
    h3 = jnp.einsum("bsd,fd->bsf", x, W3)
    z = h1 * jax.nn.sigmoid(h1) * h3
    ref = jnp.einsum("bsf,df->bsd", z, W2)
    assert out.shape == ref.shape == (batch, seq, d_model)
    assert jnp.allclose(out, ref, atol=1e-4, rtol=1e-4)

    print("KERNEL_OK")
</pallas_src>

<mosaic_0001>
module attributes {stable_mosaic.version = 11 : i64} {
  func.func @swiglu_kernel(%arg0: i32, %arg1: i32, %arg2: memref<16x64xf32, #tpu.memory_space<vmem>>, %arg3: memref<192x64xf32, #tpu.memory_space<vmem>>, %arg4: memref<192x64xf32, #tpu.memory_space<vmem>>, %arg5: memref<64x192xf32, #tpu.memory_space<vmem>>, %arg6: memref<16x64xf32, #tpu.memory_space<vmem>>, %arg7: memref<16x64xf32, #tpu.memory_space<vmem>>) attributes {dimension_semantics = [#tpu.dimension_semantics<parallel>, #tpu.dimension_semantics<arbitrary>], iteration_bounds = array<i64: 1, 1>, scalar_prefetch = 0 : i64, scratch_operands = 1 : i64, tpu.core_type = #tpu.core_type<tc>, window_params = [{transform_indices = @transform_0, window_bounds = array<i64: 16, 64>}, {transform_indices = @transform_1, window_bounds = array<i64: 192, 64>}, {transform_indices = @transform_2, window_bounds = array<i64: 192, 64>}, {transform_indices = @transform_3, window_bounds = array<i64: 64, 192>}, {transform_indices = @transform_4, window_bounds = array<i64: 16, 64>}]} {
    %c0_i32 = arith.constant 0 : i32
    %0 = arith.cmpi eq, %arg1, %c0_i32 : i32
    %1 = arith.extui %0 : i1 to i32
    %c0_i32_0 = arith.constant 0 : i32
    %2 = arith.cmpi ne, %1, %c0_i32_0 : i32
    scf.if %2 {
      %cst_17 = arith.constant 0.000000e+00 : f32
      %23 = vector.broadcast %cst_17 : f32 to vector<16x64xf32>
      %c0_18 = arith.constant 0 : index
      %c0_19 = arith.constant 0 : index
      %24 = vector.load %arg7[%c0_18, %c0_19] : memref<16x64xf32, #tpu.memory_space<vmem>>, vector<16x64xf32>
      tpu.vector_store %arg7[%c0_18, %c0_19], %23 {strides = array<i32>} : memref<16x64xf32, #tpu.memory_space<vmem>>, vector<16x64xf32>,
    } else {
    }
    %c0 = arith.constant 0 : index
    %c0_1 = arith.constant 0 : index
    %3 = vector.load %arg2[%c0, %c0_1] : memref<16x64xf32, #tpu.memory_space<vmem>>, vector<16x64xf32>
    %c0_2 = arith.constant 0 : index
    %c0_3 = arith.constant 0 : index
    %4 = vector.load %arg3[%c0_2, %c0_3] : memref<192x64xf32, #tpu.memory_space<vmem>>, vector<192x64xf32>
    %c0_4 = arith.constant 0 : index
    %c0_5 = arith.constant 0 : index
    %5 = vector.load %arg4[%c0_4, %c0_5] : memref<192x64xf32, #tpu.memory_space<vmem>>, vector<192x64xf32>
    %c0_6 = arith.constant 0 : index
    %c0_7 = arith.constant 0 : index
    %6 = vector.load %arg5[%c0_6, %c0_7] : memref<64x192xf32, #tpu.memory_space<vmem>>, vector<64x192xf32>
    %cst = arith.constant dense<0.000000e+00> : vector<16x192xf32>
    %7 = tpu.matmul %3, %4, %cst {dimension_numbers = #tpu.dot_dimension_numbers<[1], [1], [0], [0], [0, 0, 1, 0], [], []>} : vector<16x64xf32>, vector<192x64xf32>, vector<16x192xf32> -> vector<16x192xf32>
    %cst_8 = arith.constant dense<0.000000e+00> : vector<16x192xf32>
    %8 = tpu.matmul %3, %5, %cst_8 {dimension_numbers = #tpu.dot_dimension_numbers<[1], [1], [0], [0], [0, 0, 1, 0], [], []>} : vector<16x64xf32>, vector<192x64xf32>, vector<16x192xf32> -> vector<16x192xf32>
    %9 = arith.negf %7 : vector<16x192xf32>
    %10 = math.exp %9 : vector<16x192xf32>
    %cst_9 = arith.constant 1.000000e+00 : f32
    %11 = vector.broadcast %cst_9 : f32 to vector<16x192xf32>
    %12 = arith.addf %11, %10 : vector<16x192xf32>
    %13 = arith.divf %11, %12 : vector<16x192xf32>
    %14 = arith.mulf %7, %13 : vector<16x192xf32>
    %15 = arith.mulf %14, %8 : vector<16x192xf32>
    %c0_10 = arith.constant 0 : index
    %c0_11 = arith.constant 0 : index
    %16 = vector.load %arg7[%c0_10, %c0_11] : memref<16x64xf32, #tpu.memory_space<vmem>>, vector<16x64xf32>
    %cst_12 = arith.constant dense<0.000000e+00> : vector<16x64xf32>
    %17 = tpu.matmul %15, %6, %cst_12 {dimension_numbers = #tpu.dot_dimension_numbers<[1], [1], [0], [0], [0, 0, 1, 0], [], []>} : vector<16x192xf32>, vector<64x192xf32>, vector<16x64xf32> -> vector<16x64xf32>
    %18 = arith.addf %16, %17 : vector<16x64xf32>
    %c0_13 = arith.constant 0 : index
    %c0_14 = arith.constant 0 : index
    %19 = vector.load %arg7[%c0_13, %c0_14] : memref<16x64xf32, #tpu.memory_space<vmem>>, vector<16x64xf32>
    tpu.vector_store %arg7[%c0_13, %c0_14], %18 {strides = array<i32>} : memref<16x64xf32, #tpu.memory_space<vmem>>, vector<16x64xf32>,
    %c0_i32_15 = arith.constant 0 : i32
    %20 = arith.cmpi eq, %arg1, %c0_i32_15 : i32
    %21 = arith.extui %20 : i1 to i32
    %c0_i32_16 = arith.constant 0 : i32
    %22 = arith.cmpi ne, %21, %c0_i32_16 : i32
    scf.if %22 {
      %c0_17 = arith.constant 0 : index
      %c0_18 = arith.constant 0 : index
      %23 = vector.load %arg7[%c0_17, %c0_18] : memref<16x64xf32, #tpu.memory_space<vmem>>, vector<16x64xf32>
      %c0_19 = arith.constant 0 : index
      %c0_20 = arith.constant 0 : index
      %24 = vector.load %arg6[%c0_19, %c0_20] : memref<16x64xf32, #tpu.memory_space<vmem>>, vector<16x64xf32>
      tpu.vector_store %arg6[%c0_19, %c0_20], %23 {strides = array<i32>} : memref<16x64xf32, #tpu.memory_space<vmem>>, vector<16x64xf32>,
    } else {
    }
    return
  }
  func.func @transform_0(%arg0: i32, %arg1: i32) -> (i32, i32) {
    %c0_i32 = arith.constant 0 : i32
    %c0_i32_0 = arith.constant 0 : i32
    return %arg0, %c0_i32 : i32, i32
  }
  func.func @transform_1(%arg0: i32, %arg1: i32) -> (i32, i32) {
    %c0_i32 = arith.constant 0 : i32
    %c0_i32_0 = arith.constant 0 : i32
    return %arg1, %c0_i32 : i32, i32
  }
  func.func @transform_2(%arg0: i32, %arg1: i32) -> (i32, i32) {
    %c0_i32 = arith.constant 0 : i32
    %c0_i32_0 = arith.constant 0 : i32
    return %arg1, %c0_i32 : i32, i32
  }
  func.func @transform_3(%arg0: i32, %arg1: i32) -> (i32, i32) {
    %c0_i32 = arith.constant 0 : i32
    %c0_i32_0 = arith.constant 0 : i32
    return %c0_i32, %arg1 : i32, i32
  }
  func.func @transform_4(%arg0: i32, %arg1: i32) -> (i32, i32) {
    %c0_i32 = arith.constant 0 : i32
    %c0_i32_0 = arith.constant 0 : i32
    return %arg0, %c0_i32 : i32, i32
  }
}

</mosaic_0001>

<llo_original>
// kernel: tpu_custom_call.1
$region0: #{tpu_custom_call.1}
  #allocation0 [shape = 'u32[]', space=smem, size = 0x4, offset = 0x4, fixed_abs, tag = 'smem constant byte address 0x4 - core index']
  #allocation1 [shape = 'u32[144,128]{1,0:T(1,128)}', space=vmem, size = 0x12000, scoped, tag = 'internal scratch']
  #allocation2 [shape = 'f32[16,64]{1,0:T(8,128)}', space=vmem, size = 0x2000, scoped, tag = 'scratch operand']
  %s0 = inlined_call_operand.vmem [shape: f32[16,64], index: 0, kind: input, shape index: {}]
  %s1 = inlined_call_operand.vmem [shape: f32[192,64], index: 1, kind: input, shape index: {}]
  %s2 = inlined_call_operand.vmem [shape: f32[192,64], index: 2, kind: input, shape index: {}]
  %s3 = inlined_call_operand.vmem [shape: f32[64,192], index: 3, kind: input, shape index: {}]
  %s4 = inlined_call_operand.hbm [shape: f32[16,64], index: 4, kind: output, shape index: {}]
  %s5 = sld [smem:[#allocation0]]
  $region34: #{tpu_custom_call.1} parent=0
    _
  %s7 = ssub.s32 1, %s5
  %s8 = scalar_select 0, %s7, %s5
  $region1: #{tpu_custom_call.1} parent=0
    #allocation3 [shape = 'u8[8192]{0}', space=vmem, size = 0x2000, scoped, tag = 'output window, operand 0, single buffered']
    #allocation4 [shape = 's32[1]{0}', space=sflag, size = 0x4, scoped, tag = 'scoped memory for tpu_custom_call.1']
    %9 = vsyncpa [#allocation4], 0
    // Predicated region
    $region2: #{tpu_custom_call.1} parent=1 // pred_check
      _
    $region3: #{tpu_custom_call.1} parent=1 // pred_check_branch
      %11 = sbr.rel (0) target = $region5
    $region4: #{tpu_custom_call.1} parent=1 // pred_region
      _
    $region5: #{tpu_custom_call.1} parent=1 // pred_fallthru
      _
    // Predicated region
    $region6: #{tpu_custom_call.1} parent=1 // pred_check
      _
    $region7: #{tpu_custom_call.1} parent=1 // pred_check_branch
      %13 = sbr.rel (0) target = $region9
    $region8: #{tpu_custom_call.1} parent=1 // pred_region
      _
    $region9: #{tpu_custom_call.1} parent=1 // pred_fallthru
      _
    // Predicated region
    $region10: #{tpu_custom_call.1} parent=1 // pred_check
      _
    $region11: #{tpu_custom_call.1} parent=1 // pred_check_branch
      %15 = sbr.rel (0) target = $region13
    $region12: #{tpu_custom_call.1} parent=1 // pred_region
      _
    $region13: #{tpu_custom_call.1} parent=1 // pred_fallthru
      _
    // Predicated region
    $region14: #{tpu_custom_call.1} parent=1 // pred_check
      _
    $region15: #{tpu_custom_call.1} parent=1 // pred_check_branch
      %17 = sbr.rel (0) target = $region17
    $region16: #{tpu_custom_call.1} parent=1 // pred_region
      _
    $region17: #{tpu_custom_call.1} parent=1 // pred_fallthru
      _
    %p18 = scmp.eq.s32.totalorder 0, 0
    // Predicated region
    $region18: #{tpu_custom_call.1} parent=1 // pred_check
      %p19 = pneg %p18
    $region19: #{tpu_custom_call.1} parent=1 // pred_check_branch
      %21 = sbr.rel (%p19) target = $region21
    $region20: #{tpu_custom_call.1} parent=1 // pred_region
      %vm22 = vcmask 523264
      %23 = vst.msk [vmem:[#allocation2] sm:$0xff] %vm22, 0.0
      %24 = vst.msk [vmem:[#allocation2 + $0x8] sm:$0xff] %vm22, 0.0
    $region21: #{tpu_custom_call.1} parent=1 // pred_fallthru
      _
    %v25 = vld [vmem:[%s0] sm:$0xff]
    %v26 = vld [vmem:[%s0 + $0x8] sm:$0xff]
    %v27 = vld [vmem:[%s1] sm:$0xff]
    %v28 = vld [vmem:[%s1 + $0x8] sm:$0xff]
    %v29 = vld [vmem:[%s1 + $0x10] sm:$0xff]
    %v30 = vld [vmem:[%s1 + $0x18] sm:$0xff]
    %v31 = vld [vmem:[%s1 + $0x20] sm:$0xff]
    %v32 = vld [vmem:[%s1 + $0x28] sm:$0xff]
    %v33 = vld [vmem:[%s1 + $0x30] sm:$0xff]
    %v34 = vld [vmem:[%s1 + $0x38] sm:$0xff]
    %v35 = vld [vmem:[%s1 + $0x40] sm:$0xff]
    %v36 = vld [vmem:[%s1 + $0x48] sm:$0xff]
    %v37 = vld [vmem:[%s1 + $0x50] sm:$0xff]
    %v38 = vld [vmem:[%s1 + $0x58] sm:$0xff]
    %v39 = vld [vmem:[%s1 + $0x60] sm:$0xff]
    %v40 = vld [vmem:[%s1 + $0x68] sm:$0xff]
    %v41 = vld [vmem:[%s1 + $0x70] sm:$0xff]
    %v42 = vld [vmem:[%s1 + $0x78] sm:$0xff]
    %v43 = vld [vmem:[%s1 + $0x80] sm:$0xff]
    %v44 = vld [vmem:[%s1 + $0x88] sm:$0xff]
    %v45 = vld [vmem:[%s1 + $0x90] sm:$0xff]
    %v46 = vld [vmem:[%s1 + $0x98] sm:$0xff]
    %v47 = vld [vmem:[%s1 + $0xa0] sm:$0xff]
    %v48 = vld [vmem:[%s1 + $0xa8] sm:$0xff]
    %v49 = vld [vmem:[%s1 + $0xb0] sm:$0xff]
    %v50 = vld [vmem:[%s1 + $0xb8] sm:$0xff]
    %v51 = vld [vmem:[%s2] sm:$0xff]
    %v52 = vld [vmem:[%s2 + $0x8] sm:$0xff]
    %v53 = vld [vmem:[%s2 + $0x10] sm:$0xff]
    %v54 = vld [vmem:[%s2 + $0x18] sm:$0xff]
    %v55 = vld [vmem:[%s2 + $0x20] sm:$0xff]
    %v56 = vld [vmem:[%s2 + $0x28] sm:$0xff]
    %v57 = vld [vmem:[%s2 + $0x30] sm:$0xff]
    %v58 = vld [vmem:[%s2 + $0x38] sm:$0xff]
    %v59 = vld [vmem:[%s2 + $0x40] sm:$0xff]
    %v60 = vld [vmem:[%s2 + $0x48] sm:$0xff]
    %v61 = vld [vmem:[%s2 + $0x50] sm:$0xff]
    %v62 = vld [vmem:[%s2 + $0x58] sm:$0xff]
    %v63 = vld [vmem:[%s2 + $0x60] sm:$0xff]
    %v64 = vld [vmem:[%s2 + $0x68] sm:$0xff]
    %v65 = vld [vmem:[%s2 + $0x70] sm:$0xff]
    %v66 = vld [vmem:[%s2 + $0x78] sm:$0xff]
    %v67 = vld [vmem:[%s2 + $0x80] sm:$0xff]
    %v68 = vld [vmem:[%s2 + $0x88] sm:$0xff]
    %v69 = vld [vmem:[%s2 + $0x90] sm:$0xff]
    %v70 = vld [vmem:[%s2 + $0x98] sm:$0xff]
    %v71 = vld [vmem:[%s2 + $0xa0] sm:$0xff]
    %v72 = vld [vmem:[%s2 + $0xa8] sm:$0xff]
    %v73 = vld [vmem:[%s2 + $0xb0] sm:$0xff]
    %v74 = vld [vmem:[%s2 + $0xb8] sm:$0xff]
    %v75 = vld [vmem:[%s3] sm:$0xff]
    %v76 = vld [vmem:[%s3 + $0x8] sm:$0xff]
    %v77 = vld [vmem:[%s3 + $0x10] sm:$0xff]
    %v78 = vld [vmem:[%s3 + $0x18] sm:$0xff]
    %v79 = vld [vmem:[%s3 + $0x20] sm:$0xff]
    %v80 = vld [vmem:[%s3 + $0x28] sm:$0xff]
    %v81 = vld [vmem:[%s3 + $0x30] sm:$0xff]
    %v82 = vld [vmem:[%s3 + $0x38] sm:$0xff]
    %v83 = vld [vmem:[%s3 + $0x40] sm:$0xff]
    %v84 = vld [vmem:[%s3 + $0x48] sm:$0xff]
    %v85 = vld [vmem:[%s3 + $0x50] sm:$0xff]
    %v86 = vld [vmem:[%s3 + $0x58] sm:$0xff]
    %v87 = vld [vmem:[%s3 + $0x60] sm:$0xff]
    %v88 = vld [vmem:[%s3 + $0x68] sm:$0xff]
    %v89 = vld [vmem:[%s3 + $0x70] sm:$0xff]
    %v90 = vld [vmem:[%s3 + $0x78] sm:$0xff]
    %vm91 = vcmask 523264
    %v93 = vsel %vm91, %v25, 0
    %v96 = vsel %vm91, %v26, 0
    %v99 = vsel %vm91, %v27, 0
    %v102 = vsel %vm91, %v28, 0
    %v105 = vsel %vm91, %v29, 0
    %v108 = vsel %vm91, %v30, 0
    %v111 = vsel %vm91, %v31, 0
    %v114 = vsel %vm91, %v32, 0
    %v117 = vsel %vm91, %v33, 0
    %v120 = vsel %vm91, %v34, 0
    %v123 = vsel %vm91, %v35, 0
    %v126 = vsel %vm91, %v36, 0
    %v129 = vsel %vm91, %v37, 0
    %v132 = vsel %vm91, %v38, 0
    %v135 = vsel %vm91, %v39, 0
    %v138 = vsel %vm91, %v40, 0
    %v141 = vsel %vm91, %v41, 0
    %v144 = vsel %vm91, %v42, 0
    %v147 = vsel %vm91, %v43, 0
    %v150 = vsel %vm91, %v44, 0
    %v153 = vsel %vm91, %v45, 0
    %v156 = vsel %vm91, %v46, 0
    %v159 = vsel %vm91, %v47, 0
    %v162 = vsel %vm91, %v48, 0
    %v165 = vsel %vm91, %v49, 0
    %v168 = vsel %vm91, %v50, 0
    %170 = vmatprep.subr.mxu0 0.0
    %171 = vmatpush1.xpose.msra.mxu0 %v99
    %172 = vmatprep.subr.mxu0 0.0
    %173 = vmatpush1.xpose.msra.mxu0 %v102
    %174 = vmatprep.subr.mxu0 0.0
    %175 = vmatpush1.xpose.msra.mxu0 %v105
    %176 = vmatprep.subr.mxu0 0.0
    %177 = vmatpush1.xpose.msra.mxu0 %v108
    %178 = vmatprep.subr.mxu0 0.0
    %179 = vmatpush1.xpose.msra.mxu0 %v111
    %180 = vmatprep.subr.mxu0 0.0
    %181 = vmatpush1.xpose.msra.mxu0 %v114
    %182 = vmatprep.subr.mxu0 0.0
    %183 = vmatpush1.xpose.msra.mxu0 %v117
    %184 = vmatprep.subr.mxu0 0.0
    %185 = vmatpush1.xpose.msra.mxu0 %v120
    %186 = vmatprep.subr.mxu0 0.0
    %187 = vmatpush1.xpose.msra.mxu0 %v123
    %188 = vmatprep.subr.mxu0 0.0
    %189 = vmatpush1.xpose.msra.mxu0 %v126
    %190 = vmatprep.subr.mxu0 0.0
    %191 = vmatpush1.xpose.msra.mxu0 %v129
    %192 = vmatprep.subr.mxu0 0.0
    %193 = vmatpush1.xpose.msra.mxu0 %v132
    %194 = vmatprep.subr.mxu0 0.0
    %195 = vmatpush1.xpose.msra.mxu0 %v135
    %196 = vmatprep.subr.mxu0 0.0
    %197 = vmatpush1.xpose.msra.mxu0 %v138
    %198 = vmatprep.subr.mxu0 0.0
    %199 = vmatpush1.xpose.msra.mxu0 %v141
    %200 = vmatprep.subr.mxu0 0.0
    %201 = vmatpush1.xpose.msra.mxu0 %v144
    %202 = vmatprep.subr.mxu0 0.0
    %203 = vmatpush1.xpose.msra.mxu0 %v147
    %204 = vmatprep.subr.mxu0 0.0
    %205 = vmatpush1.xpose.msra.mxu0 %v150
    %206 = vmatprep.subr.mxu0 0.0
    %207 = vmatpush1.xpose.msra.mxu0 %v153
    %208 = vmatprep.subr.mxu0 0.0
    %209 = vmatpush1.xpose.msra.mxu0 %v156
    %210 = vmatprep.subr.mxu0 0.0
    %211 = vmatpush1.xpose.msra.mxu0 %v159
    %212 = vmatprep.subr.mxu0 0.0
    %213 = vmatpush1.xpose.msra.mxu0 %v162
    %214 = vmatprep.subr.mxu0 0.0
    %215 = vmatpush1.xpose.msra.mxu0 %v165
    %216 = vmatprep.subr.mxu0 0.0
    %217 = vmatpush1.xpose.msra.mxu0 %v168
    %218 = vmatprep.subr.mxu0 0.0
    %219 = vmatpush1.xpose.msra.mxu0 0.0
    %220 = vmatprep.subr.mxu0 0.0
    %221 = vmatpush1.xpose.msra.mxu0 0.0
    %222 = vmatprep.subr.mxu0 0.0
    %223 = vmatpush1.xpose.msra.mxu0 0.0
    %224 = vmatprep.subr.mxu0 0.0
    %225 = vmatpush1.xpose.msra.mxu0 0.0
    %226 = vmatprep.subr.mxu0 0.0
    %227 = vmatpush1.xpose.msra.mxu0 0.0
    %228 = vmatprep.subr.mxu0 0.0
    %229 = vmatpush1.xpose.msra.mxu0 0.0
    %230 = vmatprep.subr.mxu0 0.0
    %231 = vmatpush1.xpose.msra.mxu0 0.0
    %232 = vmatprep.subr.mxu0 0.0
    %233 = vmatpush1.xpose.msra.mxu0 0.0
    %234 = vmatprep.mubr.f32.mxu0 0.0
    %235 = vmatmul.mubr.f32.gmra.mrb[0].mxu0 %v93
    %v236 = vpop.f32.mrb[0].mxu0
    %v237 = vadd.f32 0.0, %v236
    %v238 = vpop.f32.mrb[0].mxu0
    %v239 = vadd.f32 0.0, %v238
    %240 = vmatprep.mubr.f32.mxu0 0.0
    %241 = vmatmul.mubr.f32.gmra.mrb[0].mxu0 %v96
    %v242 = vpop.f32.mrb[0].mxu0
    %v243 = vadd.f32 0.0, %v242
    %v244 = vpop.f32.mrb[0].mxu0
    %v245 = vadd.f32 0.0, %v244
    %246 = vdwg.mxu0
    %v248 = vsel %vm91, %v51, 0
    %v251 = vsel %vm91, %v52, 0
    %v254 = vsel %vm91, %v53, 0
    %v257 = vsel %vm91, %v54, 0
    %v260 = vsel %vm91, %v55, 0
    %v263 = vsel %vm91, %v56, 0
    %v266 = vsel %vm91, %v57, 0
    %v269 = vsel %vm91, %v58, 0
    %v272 = vsel %vm91, %v59, 0
    %v275 = vsel %vm91, %v60, 0
    %v278 = vsel %vm91, %v61, 0
    %v281 = vsel %vm91, %v62, 0
    %v284 = vsel %vm91, %v63, 0
    %v287 = vsel %vm91, %v64, 0
    %v290 = vsel %vm91, %v65, 0
    %v293 = vsel %vm91, %v66, 0
    %v296 = vsel %vm91, %v67, 0
    %v299 = vsel %vm91, %v68, 0
    %v302 = vsel %vm91, %v69, 0
    %v305 = vsel %vm91, %v70, 0
    %v308 = vsel %vm91, %v71, 0
    %v311 = vsel %vm91, %v72, 0
    %v314 = vsel %vm91, %v73, 0
    %v317 = vsel %vm91, %v74, 0
    %319 = vmatprep.subr.mxu0 0.0
    %320 = vmatpush1.xpose.msra.mxu0 %v248
    %321 = vmatprep.subr.mxu0 0.0
    %322 = vmatpush1.xpose.msra.mxu0 %v251
    %323 = vmatprep.subr.mxu0 0.0
    %324 = vmatpush1.xpose.msra.mxu0 %v254
    %325 = vmatprep.subr.mxu0 0.0
    %326 = vmatpush1.xpose.msra.mxu0 %v257
    %327 = vmatprep.subr.mxu0 0.0
    %328 = vmatpush1.xpose.msra.mxu0 %v260
    %329 = vmatprep.subr.mxu0 0.0
    %330 = vmatpush1.xpose.msra.mxu0 %v263
    %331 = vmatprep.subr.mxu0 0.0
    %332 = vmatpush1.xpose.msra.mxu0 %v266
    %333 = vmatprep.subr.mxu0 0.0
    %334 = vmatpush1.xpose.msra.mxu0 %v269
    %335 = vmatprep.subr.mxu0 0.0
    %336 = vmatpush1.xpose.msra.mxu0 %v272
    %337 = vmatprep.subr.mxu0 0.0
    %338 = vmatpush1.xpose.msra.mxu0 %v275
    %339 = vmatprep.subr.mxu0 0.0
    %340 = vmatpush1.xpose.msra.mxu0 %v278
    %341 = vmatprep.subr.mxu0 0.0
    %342 = vmatpush1.xpose.msra.mxu0 %v281
    %343 = vmatprep.subr.mxu0 0.0
    %344 = vmatpush1.xpose.msra.mxu0 %v284
    %345 = vmatprep.subr.mxu0 0.0
    %346 = vmatpush1.xpose.msra.mxu0 %v287
    %347 = vmatprep.subr.mxu0 0.0
    %348 = vmatpush1.xpose.msra.mxu0 %v290
    %349 = vmatprep.subr.mxu0 0.0
    %350 = vmatpush1.xpose.msra.mxu0 %v293
    %351 = vmatprep.subr.mxu0 0.0
    %352 = vmatpush1.xpose.msra.mxu0 %v296
    %353 = vmatprep.subr.mxu0 0.0
    %354 = vmatpush1.xpose.msra.mxu0 %v299
    %355 = vmatprep.subr.mxu0 0.0
    %356 = vmatpush1.xpose.msra.mxu0 %v302
    %357 = vmatprep.subr.mxu0 0.0
    %358 = vmatpush1.xpose.msra.mxu0 %v305
    %359 = vmatprep.subr.mxu0 0.0
    %360 = vmatpush1.xpose.msra.mxu0 %v308
    %361 = vmatprep.subr.mxu0 0.0
    %362 = vmatpush1.xpose.msra.mxu0 %v311
    %363 = vmatprep.subr.mxu0 0.0
    %364 = vmatpush1.xpose.msra.mxu0 %v314
    %365 = vmatprep.subr.mxu0 0.0
    %366 = vmatpush1.xpose.msra.mxu0 %v317
    %367 = vmatprep.subr.mxu0 0.0
    %368 = vmatpush1.xpose.msra.mxu0 0.0
    %369 = vmatprep.subr.mxu0 0.0
    %370 = vmatpush1.xpose.msra.mxu0 0.0
    %371 = vmatprep.subr.mxu0 0.0
    %372 = vmatpush1.xpose.msra.mxu0 0.0
    %373 = vmatprep.subr.mxu0 0.0
    %374 = vmatpush1.xpose.msra.mxu0 0.0
    %375 = vmatprep.subr.mxu0 0.0
    %376 = vmatpush1.xpose.msra.mxu0 0.0
    %377 = vmatprep.subr.mxu0 0.0
    %378 = vmatpush1.xpose.msra.mxu0 0.0
    %379 = vmatprep.subr.mxu0 0.0
    %380 = vmatpush1.xpose.msra.mxu0 0.0
    %381 = vmatprep.subr.mxu0 0.0
    %382 = vmatpush1.xpose.msra.mxu0 0.0
    %383 = vmatprep.mubr.f32.mxu0 0.0
    %384 = vmatmul.mubr.f32.gmra.mrb[0].mxu0 %v93
    %v385 = vpop.f32.mrb[0].mxu0
    %v386 = vadd.f32 0.0, %v385
    %v387 = vpop.f32.mrb[0].mxu0
    %v388 = vadd.f32 0.0, %v387
    %389 = vmatprep.mubr.f32.mxu0 0.0
    %390 = vmatmul.mubr.f32.gmra.mrb[0].mxu0 %v96
    %v391 = vpop.f32.mrb[0].mxu0
    %v392 = vadd.f32 0.0, %v391
    %v393 = vpop.f32.mrb[0].mxu0
    %v394 = vadd.f32 0.0, %v393
    %395 = vdwg.mxu0
    %v396 = vxor.u32 %v237, 2147483648
    %v397 = vxor.u32 %v239, 2147483648
    %v398 = vxor.u32 %v243, 2147483648
    %v399 = vxor.u32 %v245, 2147483648
    %v400 = vmul.f32 %v396, 1.442695
    %v401 = vpow.pop %v400
    %v402 = vmul.f32 %v397, 1.442695
    %v403 = vpow.pop %v402
    %v404 = vmul.f32 %v398, 1.442695
    %v405 = vpow.pop %v404
    %v406 = vmul.f32 %v399, 1.442695
    %v407 = vpow.pop %v406
    %v408 = vadd.f32 %v401, 1.0
    %v409 = vadd.f32 %v403, 1.0
    %v410 = vadd.f32 %v405, 1.0
    %v411 = vadd.f32 %v407, 1.0
    %v412 = vrcp.pop %v408
    %v413 = vmul.f32 1.0, %v412
    %v414 = vrcp.pop %v409
    %v415 = vmul.f32 1.0, %v414
    %v416 = vrcp.pop %v410
    %v417 = vmul.f32 1.0, %v416
    %v418 = vrcp.pop %v411
    %v419 = vmul.f32 1.0, %v418
    %v420 = vmul.f32 %v237, %v413
    %v421 = vmul.f32 %v239, %v415
    %v422 = vmul.f32 %v243, %v417
    %v423 = vmul.f32 %v245, %v419
    %v424 = vmul.f32 %v420, %v386
    %v425 = vmul.f32 %v421, %v388
    %v426 = vmul.f32 %v422, %v392
    %v427 = vmul.f32 %v423, %v394
    %v428 = vld [vmem:[#allocation2] sm:$0xff]
    %v429 = vld [vmem:[#allocation2 + $0x8] sm:$0xff]
    %v431 = vsel %vm91, %v425, 0
    %v434 = vsel %vm91, %v427, 0
    %v437 = vsel %vm91, %v76, 0
    %v440 = vsel %vm91, %v78, 0
    %v443 = vsel %vm91, %v80, 0
    %v446 = vsel %vm91, %v82, 0
    %v449 = vsel %vm91, %v84, 0
    %v452 = vsel %vm91, %v86, 0
    %v455 = vsel %vm91, %v88, 0
    %v458 = vsel %vm91, %v90, 0
    %460 = vmatprep.subr.mxu0 %v437
    %461 = vmatpush1.xpose.msra.mxu0 %v75
    %462 = vmatprep.subr.mxu0 %v440
    %463 = vmatpush1.xpose.msra.mxu0 %v77
    %464 = vmatprep.subr.mxu0 %v443
    %465 = vmatpush1.xpose.msra.mxu0 %v79
    %466 = vmatprep.subr.mxu0 %v446
    %467 = vmatpush1.xpose.msra.mxu0 %v81
    %468 = vmatprep.subr.mxu0 %v449
    %469 = vmatpush1.xpose.msra.mxu0 %v83
    %470 = vmatprep.subr.mxu0 %v452
    %471 = vmatpush1.xpose.msra.mxu0 %v85
    %472 = vmatprep.subr.mxu0 %v455
    %473 = vmatpush1.xpose.msra.mxu0 %v87
    %474 = vmatprep.subr.mxu0 %v458
    %475 = vmatpush1.xpose.msra.mxu0 %v89
    %476 = vmatprep.subr.mxu0 0.0
    %477 = vmatpush1.xpose.msra.mxu0 0.0
    %478 = vmatprep.subr.mxu0 0.0
    %479 = vmatpush1.xpose.msra.mxu0 0.0
    %480 = vmatprep.subr.mxu0 0.0
    %481 = vmatpush1.xpose.msra.mxu0 0.0
    %482 = vmatprep.subr.mxu0 0.0
    %483 = vmatpush1.xpose.msra.mxu0 0.0
    %484 = vmatprep.subr.mxu0 0.0
    %485 = vmatpush1.xpose.msra.mxu0 0.0
    %486 = vmatprep.subr.mxu0 0.0
    %487 = vmatpush1.xpose.msra.mxu0 0.0
    %488 = vmatprep.subr.mxu0 0.0
    %489 = vmatpush1.xpose.msra.mxu0 0.0
    %490 = vmatprep.subr.mxu0 0.0
    %491 = vmatpush1.xpose.msra.mxu0 0.0
    %492 = vmatprep.subr.mxu0 0.0
    %493 = vmatpush1.xpose.msra.mxu0 0.0
    %494 = vmatprep.subr.mxu0 0.0
    %495 = vmatpush1.xpose.msra.mxu0 0.0
    %496 = vmatprep.subr.mxu0 0.0
    %497 = vmatpush1.xpose.msra.mxu0 0.0
    %498 = vmatprep.subr.mxu0 0.0
    %499 = vmatpush1.xpose.msra.mxu0 0.0
    %500 = vmatprep.subr.mxu0 0.0
    %501 = vmatpush1.xpose.msra.mxu0 0.0
    %502 = vmatprep.subr.mxu0 0.0
    %503 = vmatpush1.xpose.msra.mxu0 0.0
    %504 = vmatprep.subr.mxu0 0.0
    %505 = vmatpush1.xpose.msra.mxu0 0.0
    %506 = vmatprep.subr.mxu0 0.0
    %507 = vmatpush1.xpose.msra.mxu0 0.0
    %508 = vmatprep.subr.mxu0 0.0
    %509 = vmatpush1.xpose.msra.mxu0 0.0
    %510 = vmatprep.subr.mxu0 0.0
    %511 = vmatpush1.xpose.msra.mxu0 0.0
    %512 = vmatprep.subr.mxu0 0.0
    %513 = vmatpush1.xpose.msra.mxu0 0.0
    %514 = vmatprep.subr.mxu0 0.0
    %515 = vmatpush1.xpose.msra.mxu0 0.0
    %516 = vmatprep.subr.mxu0 0.0
    %517 = vmatpush1.xpose.msra.mxu0 0.0
    %518 = vmatprep.subr.mxu0 0.0
    %519 = vmatpush1.xpose.msra.mxu0 0.0
    %520 = vmatprep.subr.mxu0 0.0
    %521 = vmatpush1.xpose.msra.mxu0 0.0
    %522 = vmatprep.subr.mxu0 0.0
    %523 = vmatpush1.xpose.msra.mxu0 0.0
    %524 = vmatprep.mubr.f32.mxu0 %v431
    %525 = vmatmul.mubr.f32.gmra.mrb[0].mxu0 %v424
    %v526 = vpop.f32.mrb[0].mxu0
    %v527 = vadd.f32 0.0, %v526
    %v528 = vpop.f32.mrb[0].mxu0
    %529 = vmatprep.mubr.f32.mxu0 %v434
    %530 = vmatmul.mubr.f32.gmra.mrb[0].mxu0 %v426
    %v531 = vpop.f32.mrb[0].mxu0
    %v532 = vadd.f32 0.0, %v531
    %v533 = vpop.f32.mrb[0].mxu0
    %534 = vdwg.mxu0
    %v535 = vadd.f32 %v428, %v527
    %v536 = vadd.f32 %v429, %v532
    %537 = vst.msk [vmem:[#allocation2] sm:$0xff] %vm91, %v535
    %538 = vst.msk [vmem:[#allocation2 + $0x8] sm:$0xff] %vm91, %v536
    // Predicated region
    $region22: #{tpu_custom_call.1} parent=1 // pred_check
      %p539 = pneg %p18
    $region23: #{tpu_custom_call.1} parent=1 // pred_check_branch
      %541 = sbr.rel (%p539) target = $region25
    $region24: #{tpu_custom_call.1} parent=1 // pred_region
      %v542 = vld [vmem:[#allocation2] sm:$0xff]
      %v543 = vld [vmem:[#allocation2 + $0x8] sm:$0xff]
      %544 = vst.msk [vmem:[#allocation3] sm:$0xff] %vm91, %v542
      %545 = vst.msk [vmem:[#allocation3 + $0x8] sm:$0xff] %vm91, %v543
    $region25: #{tpu_custom_call.1} parent=1 // pred_fallthru
      _
    // Predicated region
    $region26: #{tpu_custom_call.1} parent=1 // pred_check
      _
    $region27: #{tpu_custom_call.1} parent=1 // pred_check_branch
      %547 = sbr.rel (0) target = $region29
    $region28: #{tpu_custom_call.1} parent=1 // pred_region
      %s549 = ssub.s32 256, 256
      %550 = vsyncadd [#allocation4], %s549
      %s551 = sshll.u32 [#allocation3], 4
      %s552 = int_to_ptr.vmem [resolvable:$true] %s551
      %557 = dma.vmem_to_hbm [thread:$0]  %s552, 256, %s4, [#allocation4], 128, 128, 8
    $region29: #{tpu_custom_call.1} parent=1 // pred_fallthru
      _
    // Predicated region
    $region30: #{tpu_custom_call.1} parent=1 // pred_check
      _
    $region31: #{tpu_custom_call.1} parent=1 // pred_check_branch
      %559 = sbr.rel (0) target = $region33
    $region32: #{tpu_custom_call.1} parent=1 // pred_region
      %560 = dma.done [#allocation4], 256
    $region33: #{tpu_custom_call.1} parent=1 // pred_fallthru
      _
    %561 = vsyncpa [#allocation4], 1

</llo_original>
